<compile_context>
chip_gen: v6e
topology: v6e:2x2x1
jax: 0.10.0
libtpu: 0.0.40
codegen_flags: <defaults>
</compile_context>

<pallas_src>
import jax
import jax.numpy as jnp
import numpy as np
from jax.experimental import pallas as pl
from jax.experimental.pallas import tpu as pltpu

_LANE = 128


def _cdiv(a, b):
    return -(-a // b)


def _round_up(x, m):
    return _cdiv(x, m) * m


def _lowest(dtype):
    dtype = jnp.dtype(dtype)
    if jnp.issubdtype(dtype, jnp.floating):
        return float("-inf")
    return int(jnp.iinfo(dtype).min)


def _vmem_budget():
    """Return (block footprint budget, scoped vmem limit) in bytes."""
    try:
        cap = int(getattr(pltpu.get_tpu_info(), "vmem_capacity_bytes", 0)) or (64 << 20)
    except Exception:
        cap = 64 << 20                      # conservative: v7x per-TensorCore VMEM
    if cap <= (72 << 20):                   # v7x: 64 MiB per TensorCore
        budget = 40 << 20
    else:                                   # v5e / v6e: 128 MiB
        budget = 56 << 20
    limit = min(cap - (8 << 20), budget + (16 << 20))
    return budget, limit


def _choose_tiles(g, lrows, width, itemsize, budget):
    """Pick (tg, tl): gene tile and packed-row-chunk tile.

    VMEM footprint ~ 2*tg*tl*width (dbl-buffered in) + 2*tg*width (dbl-buffered
    out) + tg*width (accumulator scratch), all * itemsize.
    """
    sub = 8 if itemsize >= 4 else 16        # sublane alignment (f32 / bf16)

    # Gene tile: sublane aligned; cap so a large gene count still yields >= 4
    # gene-axis grid steps (>= 2 blocks per TensorCore on dual-core v7x so the
    # pipeline always has a next block to prefetch).
    tg = _round_up(min(max(g, 1), 512), sub)
    if g >= 4 * sub:
        tg = min(tg, _round_up(_cdiv(g, 4), sub))

    def footprint(tg_, tl_):
        return (2 * tg_ * tl_ * width + 3 * tg_ * width) * itemsize

    while tg > sub and footprint(tg, sub) > budget:
        tg = max(sub, ((tg // 2) // sub) * sub)

    # Row-chunk tile: fill the remaining budget, but keep each input block in
    # the ~4-16 MiB DMA sweet spot and never exceed the (padded) row count.
    per_row = 2 * tg * width * itemsize
    tl_budget = max(sub, (((budget - 3 * tg * width * itemsize) // per_row) // sub) * sub)
    tl_cap = max(sub, (((16 << 20) // (tg * width * itemsize)) // sub) * sub)
    tl = min(tl_budget, tl_cap, _round_up(lrows, sub))
    return tg, max(sub, tl)


def _make_kernel(d, width):
    def kernel(x_ref, o_ref, acc_ref):
        # x_ref: (TG, TL, W) -inf-padded packed rows; o_ref/acc_ref: (TG, W).
        k = pl.program_id(1)

        @pl.when(k == 0)
        def _init():
            acc_ref[...] = jnp.full(acc_ref.shape, _lowest(acc_ref.dtype),
                                    acc_ref.dtype)

        acc_ref[...] = jnp.maximum(acc_ref[...], jnp.max(x_ref[...], axis=1))

        @pl.when(k == pl.num_programs(1) - 1)
        def _finalize():
            y = acc_ref[...]
            # Finish the per-gene reduction across the `pack` lane segments
            # with XLU rotations (no-op when pack == 1, i.e. width == d).
            shift = width // 2
            while shift >= d:
                y = jnp.maximum(y, pltpu.roll(y, shift, axis=1))
                shift //= 2
            o_ref[...] = y.astype(o_ref.dtype)

    return kernel


def _max_aggregate(feats, dtype):
    """feats: list of (n_i, D) arrays.  Returns (G, D) per-gene row-max."""
    g = len(feats)
    d = int(feats[0].shape[1])
    assert all(int(f.shape[1]) == d for f in feats), "feature dims must match"
    lmax = max(int(f.shape[0]) for f in feats)
    itemsize = jnp.dtype(dtype).itemsize

    # Pack `pack` consecutive rows of the same gene along lanes so the kernel
    # sees 128-wide lane-dense blocks (contiguous reshape only, no transpose).
    pack = _LANE // d if (d < _LANE and _LANE % d == 0) else 1
    width = pack * d
    lrows = _cdiv(lmax, pack)               # packed rows per gene

    budget, vmem_limit = _vmem_budget()
    tg, tl = _choose_tiles(g, lrows, width, itemsize, budget)
    g_pad = _round_up(g, tg)
    l_pad = _round_up(lrows, tl)
    rows_per_gene = l_pad * pack

    # Build the padded/packed input: ONE -inf fill + ONE row scatter.
    # TODO(synk): for very ragged inputs, switch to a concatenated (sum n_i, D)
    # rows tensor + scalar-prefetched per-gene offsets to avoid O(G*Lmax*D)
    # padded HBM traffic entirely.
    fill = _lowest(dtype)
    rows = jnp.concatenate([f.astype(dtype) for f in feats], axis=0)
    row_ids = np.concatenate(
        [gi * rows_per_gene + np.arange(int(f.shape[0]))
         for gi, f in enumerate(feats)])
    dest = jnp.full((g_pad * rows_per_gene, d), fill, dtype)
    dest = dest.at[jnp.asarray(row_ids, dtype=jnp.int32)].set(rows)
    x = dest.reshape(g_pad, l_pad, width)   # free contiguous reshape

    out = pl.pallas_call(
        _make_kernel(d, width),
        out_shape=jax.ShapeDtypeStruct((g_pad, width), dtype),
        grid_spec=pltpu.PrefetchScalarGridSpec(
            num_scalar_prefetch=0,
            grid=(g_pad // tg, l_pad // tl),
            in_specs=[pl.BlockSpec((tg, tl, width), lambda i, k: (i, k, 0))],
            out_specs=pl.BlockSpec((tg, width), lambda i, k: (i, 0)),
            scratch_shapes=[pltpu.VMEM((tg, width), dtype)],
        ),
        compiler_params=pltpu.CompilerParams(
            dimension_semantics=("parallel", "arbitrary"),
            vmem_limit_bytes=int(vmem_limit),
        ),
    )(x)

    return out[:g, :d]


def max_aggregator_forward(gene_features):
    """Pallas equivalent of MaxAggregator.forward.

    gene_features: dict {key -> (n_i, D) array}, n_i >= 1.
    returns: (G, D), rows ordered by sorted(keys), dtype preserved.
    """
    node_seq = sorted(list(gene_features.keys()))
    feats = [jnp.asarray(gene_features[k]) for k in node_seq]
    dtype = jnp.result_type(*feats)
    return _max_aggregate(feats, dtype)


if __name__ == "__main__":
    # MaxAggregator.__init__(feature_dim) has no parameters -> nothing to init.
    key = jax.random.PRNGKey(0)
    D = 32
    lengths = {0: 5, 1: 3, 2: 7, 3: 4, 5: 6}   # ragged per-gene row counts
    gene_features = {}
    for k, n in lengths.items():
        key, sub = jax.random.split(key)
        gene_features[k] = jax.random.normal(sub, (n, D), dtype=jnp.float32)

    out = jax.block_until_ready(max_aggregator_forward(gene_features))

    # Pure-JAX reference (matches torch.max(feature, dim=0)[0] + cat).
    ref = jnp.stack(
        [jnp.max(gene_features[k], axis=0) for k in sorted(gene_features)], axis=0
    )
    assert out.shape == ref.shape == (len(lengths), D)
    assert jnp.allclose(out, ref), "mismatch vs reference"
    print("KERNEL_OK")
</pallas_src>

<mosaic_0001>
module attributes {stable_mosaic.version = 11 : i64} {
  func.func @kernel(%arg0: i32, %arg1: i32, %arg2: memref<8x8x128xf32, #tpu.memory_space<vmem>>, %arg3: memref<8x128xf32, #tpu.memory_space<vmem>>, %arg4: memref<8x128xf32, #tpu.memory_space<vmem>>) attributes {dimension_semantics = [#tpu.dimension_semantics<parallel>, #tpu.dimension_semantics<arbitrary>], iteration_bounds = array<i64: 1, 1>, scalar_prefetch = 0 : i64, scratch_operands = 1 : i64, tpu.core_type = #tpu.core_type<tc>, window_params = [{transform_indices = @transform_0, window_bounds = array<i64: 8, 8, 128>}, {transform_indices = @transform_1, window_bounds = array<i64: 8, 128>}]} {
    %c0_i32 = arith.constant 0 : i32
    %0 = arith.cmpi eq, %arg1, %c0_i32 : i32
    %1 = arith.extui %0 : i1 to i32
    %c0_i32_0 = arith.constant 0 : i32
    %2 = arith.cmpi ne, %1, %c0_i32_0 : i32
    scf.if %2 {
      %cst_9 = arith.constant 0xFF800000 : f32
      %11 = vector.broadcast %cst_9 : f32 to vector<8x128xf32>
      %c0_10 = arith.constant 0 : index
      %c0_11 = arith.constant 0 : index
      %12 = vector.load %arg4[%c0_10, %c0_11] : memref<8x128xf32, #tpu.memory_space<vmem>>, vector<8x128xf32>
      tpu.vector_store %arg4[%c0_10, %c0_11], %11 {strides = array<i32>} : memref<8x128xf32, #tpu.memory_space<vmem>>, vector<8x128xf32>,
    } else {
    }
    %c0 = arith.constant 0 : index
    %c0_1 = arith.constant 0 : index
    %3 = vector.load %arg4[%c0, %c0_1] : memref<8x128xf32, #tpu.memory_space<vmem>>, vector<8x128xf32>
    %c0_2 = arith.constant 0 : index
    %c0_3 = arith.constant 0 : index
    %c0_4 = arith.constant 0 : index
    %4 = vector.load %arg2[%c0_2, %c0_3, %c0_4] : memref<8x8x128xf32, #tpu.memory_space<vmem>>, vector<8x8x128xf32>
    %cst = arith.constant dense<0xFF800000> : vector<8x128xf32>
    %5 = vector.multi_reduction <maximumf>, %4, %cst [1] : vector<8x8x128xf32> to vector<8x128xf32>
    %6 = arith.maximumf %3, %5 : vector<8x128xf32>
    %c0_5 = arith.constant 0 : index
    %c0_6 = arith.constant 0 : index
    %7 = vector.load %arg4[%c0_5, %c0_6] : memref<8x128xf32, #tpu.memory_space<vmem>>, vector<8x128xf32>
    tpu.vector_store %arg4[%c0_5, %c0_6], %6 {strides = array<i32>} : memref<8x128xf32, #tpu.memory_space<vmem>>, vector<8x128xf32>,
    %c0_i32_7 = arith.constant 0 : i32
    %8 = arith.cmpi eq, %arg1, %c0_i32_7 : i32
    %9 = arith.extui %8 : i1 to i32
    %c0_i32_8 = arith.constant 0 : i32
    %10 = arith.cmpi ne, %9, %c0_i32_8 : i32
    scf.if %10 {
      %c0_9 = arith.constant 0 : index
      %c0_10 = arith.constant 0 : index
      %11 = vector.load %arg4[%c0_9, %c0_10] : memref<8x128xf32, #tpu.memory_space<vmem>>, vector<8x128xf32>
      %c64_i32 = arith.constant 64 : i32
      %12 = tpu.dynamic_rotate %11 by %c64_i32 dim 1 : vector<8x128xf32>, i32 -> vector<8x128xf32>
      %13 = arith.maximumf %11, %12 : vector<8x128xf32>
      %c32_i32 = arith.constant 32 : i32
      %14 = tpu.dynamic_rotate %13 by %c32_i32 dim 1 : vector<8x128xf32>, i32 -> vector<8x128xf32>
      %15 = arith.maximumf %13, %14 : vector<8x128xf32>
      %c0_11 = arith.constant 0 : index
      %c0_12 = arith.constant 0 : index
      %16 = vector.load %arg3[%c0_11, %c0_12] : memref<8x128xf32, #tpu.memory_space<vmem>>, vector<8x128xf32>
      tpu.vector_store %arg3[%c0_11, %c0_12], %15 {strides = array<i32>} : memref<8x128xf32, #tpu.memory_space<vmem>>, vector<8x128xf32>,
    } else {
    }
    return
  }
  func.func @transform_0(%arg0: i32, %arg1: i32) -> (i32, i32, i32) {
    %c0_i32 = arith.constant 0 : i32
    %c0_i32_0 = arith.constant 0 : i32
    return %arg0, %arg1, %c0_i32 : i32, i32, i32
  }
  func.func @transform_1(%arg0: i32, %arg1: i32) -> (i32, i32) {
    %c0_i32 = arith.constant 0 : i32
    %c0_i32_0 = arith.constant 0 : i32
    return %arg0, %c0_i32 : i32, i32
  }
}

</mosaic_0001>

<llo_original>
// kernel: tpu_custom_call.1
$region0: #{tpu_custom_call.1}
  #allocation0 [shape = 'u32[]', space=smem, size = 0x4, offset = 0x4, fixed_abs, tag = 'smem constant byte address 0x4 - core index']
  #allocation1 [shape = 'u32[144,128]{1,0:T(1,128)}', space=vmem, size = 0x12000, scoped, tag = 'internal scratch']
  #allocation2 [shape = 'f32[8,128]{1,0:T(8,128)}', space=vmem, size = 0x1000, scoped, tag = 'scratch operand']
  %s0 = inlined_call_operand.hbm [shape: f32[8,8,128], index: 0, kind: input, shape index: {}]
  %s1 = inlined_call_operand.hbm [shape: f32[8,128], index: 1, kind: output, shape index: {}]
  %s2 = sld [smem:[#allocation0]]
  $region26: #{tpu_custom_call.1} parent=0
    _
  %s4 = ssub.s32 1, %s2
  %s5 = scalar_select 0, %s4, %s2
  $region1: #{tpu_custom_call.1} parent=0
    #allocation3 [shape = 'u8[32768]{0}', space=vmem, size = 0x8000, scoped, tag = 'input window, operand 0, single buffered']
    #allocation4 [shape = 's32[1]{0}', space=sflag, size = 0x4, scoped, tag = 'scoped memory for tpu_custom_call.1']
    #allocation5 [shape = 's32[1]{0}', space=sflag, size = 0x4, scoped, tag = 'scoped memory for tpu_custom_call.1']
    #allocation6 [shape = 'u8[4096]{0}', space=vmem, size = 0x1000, scoped, tag = 'output window, operand 0, single buffered']
    %6 = vsyncpa [#allocation4], 0
    %7 = vsyncpa [#allocation5], 0
    // Predicated region
    $region2: #{tpu_custom_call.1} parent=1 // pred_check
      _
    $region3: #{tpu_custom_call.1} parent=1 // pred_check_branch
      %9 = sbr.rel (0) target = $region5
    $region4: #{tpu_custom_call.1} parent=1 // pred_region
      %s11 = ssub.s32 1024, 1024
      %12 = vsyncadd [#allocation4], %s11
      %s13 = sshll.u32 [#allocation3], 4
      %s14 = int_to_ptr.vmem [resolvable:$true] %s13
      %19 = dma.hbm_to_vmem [thread:$0]  %s0, 1024, %s14, [#allocation4], 128, 128, 8
    $region5: #{tpu_custom_call.1} parent=1 // pred_fallthru
      _
    // Predicated region
    $region6: #{tpu_custom_call.1} parent=1 // pred_check
      _
    $region7: #{tpu_custom_call.1} parent=1 // pred_check_branch
      %21 = sbr.rel (0) target = $region9
    $region8: #{tpu_custom_call.1} parent=1 // pred_region
      %22 = dma.done [#allocation4], 1024
    $region9: #{tpu_custom_call.1} parent=1 // pred_fallthru
      _
    %p23 = scmp.eq.s32.totalorder 0, 0
    // Predicated region
    $region10: #{tpu_custom_call.1} parent=1 // pred_check
      %p24 = pneg %p23
    $region11: #{tpu_custom_call.1} parent=1 // pred_check_branch
      %26 = sbr.rel (%p24) target = $region13
    $region12: #{tpu_custom_call.1} parent=1 // pred_region
      %27 = vst [vmem:[#allocation2] sm:$0xff] -inf
    $region13: #{tpu_custom_call.1} parent=1 // pred_fallthru
      _
    %v28 = vld [vmem:[#allocation2] sm:$0xff]
    %v29 = vld [vmem:[#allocation3] sm:$0xff]
    %v30 = vld [vmem:[#allocation3 + $0x8] sm:$0xff]
    %v31 = vld [vmem:[#allocation3 + $0x10] sm:$0xff]
    %v32 = vld [vmem:[#allocation3 + $0x18] sm:$0xff]
    %v33 = vld [vmem:[#allocation3 + $0x20] sm:$0xff]
    %v34 = vld [vmem:[#allocation3 + $0x28] sm:$0xff]
    %v35 = vld [vmem:[#allocation3 + $0x30] sm:$0xff]
    %v36 = vld [vmem:[#allocation3 + $0x38] sm:$0xff]
    %v37 = vrot.slane %v29, 4
    %v38 = vmax.f32 %v29, %v37
    %v39 = vrot.slane %v38, 2
    %v40 = vmax.f32 %v38, %v39
    %v41 = vrot.slane %v40, 1
    %v42 = vmax.f32 %v40, %v41
    %v43 = vrot.slane %v30, 4
    %v44 = vmax.f32 %v30, %v43
    %v45 = vrot.slane %v44, 2
    %v46 = vmax.f32 %v44, %v45
    %v47 = vrot.slane %v46, 1
    %v48 = vmax.f32 %v46, %v47
    %v49 = vrot.slane %v31, 4
    %v50 = vmax.f32 %v31, %v49
    %v51 = vrot.slane %v50, 2
    %v52 = vmax.f32 %v50, %v51
    %v53 = vrot.slane %v52, 1
    %v54 = vmax.f32 %v52, %v53
    %v55 = vrot.slane %v32, 4
    %v56 = vmax.f32 %v32, %v55
    %v57 = vrot.slane %v56, 2
    %v58 = vmax.f32 %v56, %v57
    %v59 = vrot.slane %v58, 1
    %v60 = vmax.f32 %v58, %v59
    %v61 = vrot.slane %v33, 4
    %v62 = vmax.f32 %v33, %v61
    %v63 = vrot.slane %v62, 2
    %v64 = vmax.f32 %v62, %v63
    %v65 = vrot.slane %v64, 1
    %v66 = vmax.f32 %v64, %v65
    %v67 = vrot.slane %v34, 4
    %v68 = vmax.f32 %v34, %v67
    %v69 = vrot.slane %v68, 2
    %v70 = vmax.f32 %v68, %v69
    %v71 = vrot.slane %v70, 1
    %v72 = vmax.f32 %v70, %v71
    %v73 = vrot.slane %v35, 4
    %v74 = vmax.f32 %v35, %v73
    %v75 = vrot.slane %v74, 2
    %v76 = vmax.f32 %v74, %v75
    %v77 = vrot.slane %v76, 1
    %v78 = vmax.f32 %v76, %v77
    %v79 = vrot.slane %v36, 4
    %v80 = vmax.f32 %v36, %v79
    %v81 = vrot.slane %v80, 2
    %v82 = vmax.f32 %v80, %v81
    %v83 = vrot.slane %v82, 1
    %v84 = vmax.f32 %v82, %v83
    %vm93 = vcmask 1041409
    %v94 = vsel %vm93, %v48, %v42
    %vm95 = vcmask 1042434
    %v96 = vsel %vm95, %v54, %v94
    %vm97 = vcmask 1043459
    %v98 = vsel %vm97, %v60, %v96
    %vm99 = vcmask 1044484
    %v100 = vsel %vm99, %v66, %v98
    %vm101 = vcmask 1045509
    %v102 = vsel %vm101, %v72, %v100
    %vm103 = vcmask 1046534
    %v104 = vsel %vm103, %v78, %v102
    %vm105 = vcmask 1047559
    %v106 = vsel %vm105, %v84, %v104
    %v108 = vmax.f32 %v28, %v106
    %109 = vst [vmem:[#allocation2] sm:$0xff] %v108
    // Predicated region
    $region14: #{tpu_custom_call.1} parent=1 // pred_check
      %p110 = pneg %p23
    $region15: #{tpu_custom_call.1} parent=1 // pred_check_branch
      %112 = sbr.rel (%p110) target = $region17
    $region16: #{tpu_custom_call.1} parent=1 // pred_region
      %v113 = vld [vmem:[#allocation2] sm:$0xff]
      %114 = vrot.lane.b32.xlu0 %v113, 64
      %v115 = vpop.permute.xlu0 %114
      %v116 = vmax.f32 %v113, %v115
      %117 = vrot.lane.b32.xlu0 %v116, 32
      %v118 = vpop.permute.xlu0 %117
      %v119 = vmax.f32 %v116, %v118
      %120 = vst [vmem:[#allocation6] sm:$0xff] %v119
    $region17: #{tpu_custom_call.1} parent=1 // pred_fallthru
      _
    // Predicated region
    $region18: #{tpu_custom_call.1} parent=1 // pred_check
      _
    $region19: #{tpu_custom_call.1} parent=1 // pred_check_branch
      %122 = sbr.rel (0) target = $region21
    $region20: #{tpu_custom_call.1} parent=1 // pred_region
      %s124 = ssub.s32 128, 128
      %125 = vsyncadd [#allocation5], %s124
      %s127 = sshll.u32 [#allocation6], 4
      %s128 = int_to_ptr.vmem [resolvable:$true] %s127
      %130 = dma.vmem_to_hbm [thread:$0]  %s128, 128, %s1, [#allocation5]
    $region21: #{tpu_custom_call.1} parent=1 // pred_fallthru
      _
    // Predicated region
    $region22: #{tpu_custom_call.1} parent=1 // pred_check
      _
    $region23: #{tpu_custom_call.1} parent=1 // pred_check_branch
      %132 = sbr.rel (0) target = $region25
    $region24: #{tpu_custom_call.1} parent=1 // pred_region
      %133 = dma.done [#allocation5], 128
    $region25: #{tpu_custom_call.1} parent=1 // pred_fallthru
      _
    %134 = vsyncpa [#allocation4], 1
    %135 = vsyncpa [#allocation5], 1

</llo_original>
